<compile_context>
chip_gen: v5e
topology: v5e:2x2
jax: 0.10.0
libtpu: 0.0.40
codegen_flags: <defaults>
</compile_context>

<pallas_src>
import functools
import math

import jax
import jax.numpy as jnp
from jax.experimental import pallas as pl
from jax.experimental.pallas import tpu as pltpu

_VMEM_LIMIT_BYTES = 32 * 1024 * 1024  # explicit, with large headroom on all gens


def _round_up(x, m):
    return ((x + m - 1) // m) * m


def _pad_to(a, shape):
    pads = [(0, t - s) for s, t in zip(a.shape, shape)]
    return jnp.pad(a, pads)


def _pick_tiles(n):
    """(row_tile, k_tile) for the adj aggregation.  Double-buffered bf16 adj
    tiles stay <= ~2 MiB, far under v5e's 16 MiB default scoped VMEM and
    v7x's 64 MiB physical VMEM; larger graphs get larger tiles so per-step
    overhead amortizes and the adj-tile DMA hides under MXU work."""
    if n >= 4096:
        return 512, 1024
    if n >= 1024:
        return 256, 512
    return 128, 128


# ---------------------------------------------------------------------------
# Kernel 1: fused dual projection   s_cat = x @ [W1|W2] + [b1|b2]
# ---------------------------------------------------------------------------
def _proj_kernel(x_ref, w_ref, b_ref, s1_ref, s2_ref, *, fp):
    s = jnp.dot(x_ref[...], w_ref[...], preferred_element_type=jnp.float32)
    s = s + b_ref[...]
    s1_ref[...] = s[:, :fp].astype(s1_ref.dtype)   # support_1 (kept f32)
    s2_ref[...] = s[:, fp:].astype(s2_ref.dtype)   # support_2 (bf16 streamed RHS)


# ---------------------------------------------------------------------------
# Kernel 2: tiled aggregation   out = act( adj @ support_2 + support_1 )
# ---------------------------------------------------------------------------
def _agg_kernel(adj_ref, s2_ref, s1_ref, o_ref, acc_ref, *,
                activation, valid_cols):
    k = pl.program_id(1)

    @pl.when(k == 0)
    def _():
        acc_ref[...] = jnp.zeros_like(acc_ref)

    acc_ref[...] += jnp.dot(adj_ref[...], s2_ref[...],
                            preferred_element_type=jnp.float32)

    @pl.when(k == pl.num_programs(1) - 1)
    def _():
        out = acc_ref[...] + s1_ref[...]
        if activation == "relu":
            out = jnp.maximum(out, 0.0)
        elif activation == "log_softmax":
            # Mask the zero-padded class lanes so they don't pollute the
            # max/sum, then numerically stable log_softmax over dim 1.
            col = jax.lax.broadcasted_iota(jnp.int32, out.shape, 1)
            out = jnp.where(col < valid_cols, out, -jnp.inf)
            m = jnp.max(out, axis=1, keepdims=True)
            shifted = out - m
            lse = jnp.log(jnp.sum(jnp.exp(shifted), axis=1, keepdims=True))
            out = shifted - lse
        # activation == "none": passthrough
        o_ref[...] = out.astype(o_ref.dtype)


# ---------------------------------------------------------------------------
# Layer wrapper: one NewConvolution layer = projection call + aggregation call
# ---------------------------------------------------------------------------
def gsage_layer(adj_p, x_p, w1, b1, w2, b2, *, activation, out_dtype, tm, tk):
    n_pad, fin = x_p.shape
    f_out = w1.shape[1]
    fp = _round_up(f_out, 128)          # lane-dense (128-padded) out features

    # Fused, zero-padded bf16 weights [fin, 2*fp]; biases stay f32 [1, 2*fp].
    w_cat = jnp.concatenate(
        [_pad_to(w1, (fin, fp)), _pad_to(w2, (fin, fp))], axis=1
    ).astype(jnp.bfloat16)
    b_cat = jnp.concatenate(
        [_pad_to(b1, (fp,)), _pad_to(b2, (fp,))]
    ).reshape(1, 2 * fp).astype(jnp.float32)

    # --- (1) projection: support_1 / support_2 for every node row tile ------
    s1, s2 = pl.pallas_call(
        functools.partial(_proj_kernel, fp=fp),
        out_shape=(jax.ShapeDtypeStruct((n_pad, fp), jnp.float32),
                   jax.ShapeDtypeStruct((n_pad, fp), jnp.bfloat16)),
        grid=(n_pad // tm,),
        in_specs=[
            pl.BlockSpec((tm, fin), lambda i: (i, 0)),
            pl.BlockSpec((fin, 2 * fp), lambda i: (0, 0)),
            pl.BlockSpec((1, 2 * fp), lambda i: (0, 0)),
        ],
        out_specs=(
            pl.BlockSpec((tm, fp), lambda i: (i, 0)),
            pl.BlockSpec((tm, fp), lambda i: (i, 0)),
        ),
        compiler_params=pltpu.CompilerParams(
            dimension_semantics=("parallel",),
            vmem_limit_bytes=_VMEM_LIMIT_BYTES),
    )(x_p, w_cat, b_cat)

    # --- (2) aggregation: streamed adj tiles against precomputed supports ---
    out = pl.pallas_call(
        functools.partial(_agg_kernel, activation=activation,
                          valid_cols=f_out),
        out_shape=jax.ShapeDtypeStruct((n_pad, fp), out_dtype),
        grid=(n_pad // tm, n_pad // tk),
        in_specs=[
            pl.BlockSpec((tm, tk), lambda i, k: (i, k)),   # adj tile
            pl.BlockSpec((tk, fp), lambda i, k: (k, 0)),   # support_2 (RHS)
            pl.BlockSpec((tm, fp), lambda i, k: (i, 0)),   # support_1
        ],
        out_specs=pl.BlockSpec((tm, fp), lambda i, k: (i, 0)),
        scratch_shapes=[pltpu.VMEM((tm, fp), jnp.float32)],
        compiler_params=pltpu.CompilerParams(
            dimension_semantics=("parallel", "arbitrary"),
            vmem_limit_bytes=_VMEM_LIMIT_BYTES),
    )(adj_p, s2, s1)
    return out


# ---------------------------------------------------------------------------
# Full model
# ---------------------------------------------------------------------------
def init_graphsage_params(key, nfeat, nhid, nclass):
    """Mirrors NewConvolution.init(): nn.Linear weights ~ U(-stdv, stdv) with
    stdv = 1/sqrt(in_features); biases in the same range.  Weights stored as
    [in, out] so the kernel does plain x @ W + b."""
    keys = jax.random.split(key, 8)

    def uni(k, shape, fan_in):
        stdv = 1.0 / math.sqrt(fan_in)
        return jax.random.uniform(k, shape, jnp.float32, -stdv, stdv)

    return {
        "gc1_w1": uni(keys[0], (nfeat, nhid), nfeat),
        "gc1_b1": uni(keys[1], (nhid,), nfeat),
        "gc1_w2": uni(keys[2], (nfeat, nhid), nfeat),
        "gc1_b2": uni(keys[3], (nhid,), nfeat),
        "gc2_w1": uni(keys[4], (nhid, nclass), nhid),
        "gc2_b1": uni(keys[5], (nclass,), nhid),
        "gc2_w2": uni(keys[6], (nhid, nclass), nhid),
        "gc2_b2": uni(keys[7], (nclass,), nhid),
        # NOTE: self.Linear1 / self.Linear2 of the torch module are unused in
        # forward(), so they are intentionally omitted.
    }


def graphsage_forward(adj, x, params, use_relu=True):
    """Full GraphSAGE forward (eval mode: dropout = identity)."""
    # TODO(synk): training-mode dropout is not implemented (eval-mode identity).
    n = adj.shape[0]
    nfeat = x.shape[1]
    nclass = params["gc2_w1"].shape[1]

    tm, tk = _pick_tiles(n)
    n_pad = _round_up(n, tk)

    adj_p = _pad_to(adj, (n_pad, n_pad)).astype(jnp.bfloat16)
    x_p = _pad_to(x, (n_pad, nfeat)).astype(jnp.bfloat16)

    # Layer 1: gc1 (+ relu).  Intermediate h is emitted in bf16 so layer 2
    # reads half the bytes from HBM.
    h = gsage_layer(adj_p, x_p,
                    params["gc1_w1"], params["gc1_b1"],
                    params["gc1_w2"], params["gc1_b2"],
                    activation="relu" if use_relu else "none",
                    out_dtype=jnp.bfloat16, tm=tm, tk=tk)

    # F.dropout(..., training=False) -> identity.

    # Layer 2: gc2 + masked log_softmax over the class dim.
    out_p = gsage_layer(adj_p, h,
                        params["gc2_w1"], params["gc2_b1"],
                        params["gc2_w2"], params["gc2_b2"],
                        activation="log_softmax",
                        out_dtype=jnp.float32, tm=tm, tk=tk)

    return out_p[:n, :nclass]


# ---------------------------------------------------------------------------
# References for validation
# ---------------------------------------------------------------------------
def _reference_forward_f32(adj, x, params, use_relu=True):
    """Pure-f32 reference of the original torch forward."""
    s1 = x @ params["gc1_w1"] + params["gc1_b1"]
    s2 = x @ params["gc1_w2"] + params["gc1_b2"]
    h = adj @ s2 + s1
    if use_relu:
        h = jnp.maximum(h, 0.0)
    s1 = h @ params["gc2_w1"] + params["gc2_b1"]
    s2 = h @ params["gc2_w2"] + params["gc2_b2"]
    o = adj @ s2 + s1
    return jax.nn.log_softmax(o, axis=1)


def _reference_forward_bf16(adj, x, params, use_relu=True):
    """Reference with the same bf16 operand / f32 accumulation scheme as the
    Pallas kernels (tight tolerance check)."""
    bf, f32 = jnp.bfloat16, jnp.float32
    adj_b = adj.astype(bf)

    def lin(xb, w, b):
        return jnp.dot(xb, w.astype(bf), preferred_element_type=f32) + b

    x_b = x.astype(bf)
    s1 = lin(x_b, params["gc1_w1"], params["gc1_b1"])
    s2 = lin(x_b, params["gc1_w2"], params["gc1_b2"])
    h = jnp.dot(adj_b, s2.astype(bf), preferred_element_type=f32) + s1
    if use_relu:
        h = jnp.maximum(h, 0.0)
    h = h.astype(bf)
    s1 = lin(h, params["gc2_w1"], params["gc2_b1"])
    s2 = lin(h, params["gc2_w2"], params["gc2_b2"])
    o = jnp.dot(adj_b, s2.astype(bf), preferred_element_type=f32) + s1
    return jax.nn.log_softmax(o, axis=1)


if __name__ == "__main__":
    key = jax.random.PRNGKey(0)
    k_adj, k_x, k_params = jax.random.split(key, 3)

    # Small graph consistent with the module: N nodes, nfeat in, nhid, nclass.
    N, nfeat, nhid, nclass = 8, 16, 32, 8

    # Dense, row-normalized adjacency (torch.mm expects dense).
    a = jax.random.uniform(k_adj, (N, N), jnp.float32)
    a = (a > 0.5).astype(jnp.float32) + jnp.eye(N, dtype=jnp.float32)
    adj = a / jnp.sum(a, axis=1, keepdims=True)

    x = jax.random.normal(k_x, (N, nfeat), jnp.float32)
    params = init_graphsage_params(k_params, nfeat, nhid, nclass)

    out = graphsage_forward(adj, x, params, use_relu=True)
    out = jax.block_until_ready(out)

    ref_bf16 = _reference_forward_bf16(adj, x, params, use_relu=True)
    ref_f32 = _reference_forward_f32(adj, x, params, use_relu=True)

    assert out.shape == (N, nclass)
    assert bool(jnp.all(jnp.isfinite(out)))
    assert jnp.allclose(out, ref_bf16, atol=1e-3, rtol=1e-3), \
        "mismatch vs bf16-matched reference"
    assert jnp.allclose(out, ref_f32, atol=1e-1, rtol=1e-1), \
        "mismatch vs f32 reference"

    print("KERNEL_OK")
</pallas_src>

<mosaic_0001>
module attributes {stable_mosaic.version = 11 : i64} {
  func.func @_proj_kernel(%arg0: i32, %arg1: memref<128x16xbf16, #tpu.memory_space<vmem>>, %arg2: memref<16x256xbf16, #tpu.memory_space<vmem>>, %arg3: memref<1x256xf32, #tpu.memory_space<vmem>>, %arg4: memref<128x128xf32, #tpu.memory_space<vmem>>, %arg5: memref<128x128xbf16, #tpu.memory_space<vmem>>) attributes {dimension_semantics = [#tpu.dimension_semantics<parallel>], iteration_bounds = array<i64: 1>, scalar_prefetch = 0 : i64, scratch_operands = 0 : i64, tpu.core_type = #tpu.core_type<tc>, window_params = [{transform_indices = @transform_0, window_bounds = array<i64: 128, 16>}, {pipeline_mode = #tpu.pipeline_mode<synchronous>, transform_indices = @transform_1, window_bounds = array<i64: 16, 256>}, {pipeline_mode = #tpu.pipeline_mode<synchronous>, transform_indices = @transform_2, window_bounds = array<i64: 1, 256>}, {transform_indices = @transform_3, window_bounds = array<i64: 128, 128>}, {transform_indices = @transform_4, window_bounds = array<i64: 128, 128>}]} {
    %c0 = arith.constant 0 : index
    %c0_0 = arith.constant 0 : index
    %0 = vector.load %arg1[%c0, %c0_0] : memref<128x16xbf16, #tpu.memory_space<vmem>>, vector<128x16xbf16>
    %c0_1 = arith.constant 0 : index
    %c0_2 = arith.constant 0 : index
    %1 = vector.load %arg2[%c0_1, %c0_2] : memref<16x256xbf16, #tpu.memory_space<vmem>>, vector<16x256xbf16>
    %cst = arith.constant dense<0.000000e+00> : vector<128x256xf32>
    %2 = tpu.matmul %0, %1, %cst {dimension_numbers = #tpu.dot_dimension_numbers<[1], [0], [0], [1], [0, 0, 1, 1], [], []>} : vector<128x16xbf16>, vector<16x256xbf16>, vector<128x256xf32> -> vector<128x256xf32>
    %c0_3 = arith.constant 0 : index
    %c0_4 = arith.constant 0 : index
    %3 = vector.load %arg3[%c0_3, %c0_4] : memref<1x256xf32, #tpu.memory_space<vmem>>, vector<1x256xf32>
    %4 = vector.broadcast %3 : vector<1x256xf32> to vector<128x256xf32>
    %5 = arith.addf %2, %4 : vector<128x256xf32>
    %6 = vector.extract_strided_slice %5 {offsets = [0, 0], sizes = [128, 128], strides = [1, 1]} : vector<128x256xf32> to vector<128x128xf32>
    %c0_5 = arith.constant 0 : index
    %c0_6 = arith.constant 0 : index
    %7 = vector.load %arg4[%c0_5, %c0_6] : memref<128x128xf32, #tpu.memory_space<vmem>>, vector<128x128xf32>
    tpu.vector_store %arg4[%c0_5, %c0_6], %6 {strides = array<i32>} : memref<128x128xf32, #tpu.memory_space<vmem>>, vector<128x128xf32>,
    %8 = vector.extract_strided_slice %5 {offsets = [0, 128], sizes = [128, 128], strides = [1, 1]} : vector<128x256xf32> to vector<128x128xf32>
    %9 = arith.truncf %8 : vector<128x128xf32> to vector<128x128xbf16>
    %c0_7 = arith.constant 0 : index
    %c0_8 = arith.constant 0 : index
    %10 = vector.load %arg5[%c0_7, %c0_8] : memref<128x128xbf16, #tpu.memory_space<vmem>>, vector<128x128xbf16>
    tpu.vector_store %arg5[%c0_7, %c0_8], %9 {strides = array<i32>} : memref<128x128xbf16, #tpu.memory_space<vmem>>, vector<128x128xbf16>,
    return
  }
  func.func @transform_0(%arg0: i32) -> (i32, i32) {
    %c0_i32 = arith.constant 0 : i32
    %c0_i32_0 = arith.constant 0 : i32
    return %arg0, %c0_i32 : i32, i32
  }
  func.func @transform_1(%arg0: i32) -> (i32, i32) {
    %c0_i32 = arith.constant 0 : i32
    %c0_i32_0 = arith.constant 0 : i32
    %c0_i32_1 = arith.constant 0 : i32
    return %c0_i32, %c0_i32_0 : i32, i32
  }
  func.func @transform_2(%arg0: i32) -> (i32, i32) {
    %c0_i32 = arith.constant 0 : i32
    %c0_i32_0 = arith.constant 0 : i32
    %c0_i32_1 = arith.constant 0 : i32
    return %c0_i32, %c0_i32_0 : i32, i32
  }
  func.func @transform_3(%arg0: i32) -> (i32, i32) {
    %c0_i32 = arith.constant 0 : i32
    %c0_i32_0 = arith.constant 0 : i32
    return %arg0, %c0_i32 : i32, i32
  }
  func.func @transform_4(%arg0: i32) -> (i32, i32) {
    %c0_i32 = arith.constant 0 : i32
    %c0_i32_0 = arith.constant 0 : i32
    return %arg0, %c0_i32 : i32, i32
  }
}

</mosaic_0001>

<llo_original>
// kernel: tpu_custom_call.1
$region0: #{tpu_custom_call.1}
  #allocation0 [shape = 'u32[]', space=smem, size = 0x4, offset = 0x4, fixed_abs, tag = 'smem constant byte address 0x4 - core index']
  #allocation1 [shape = 'u32[72,128]{1,0:T(1,128)}', space=vmem, size = 0x9000, scoped, tag = 'internal scratch']
  %s0 = inlined_call_operand.vmem [shape: bf16[128,16], index: 0, kind: input, shape index: {}]
  %s1 = inlined_call_operand.vmem [shape: bf16[16,256], index: 1, kind: input, shape index: {}]
  %s2 = inlined_call_operand.vmem [shape: f32[1,256], index: 2, kind: input, shape index: {}]
  %s3 = inlined_call_operand.hbm [shape: f32[128,128], index: 3, kind: output, shape index: {0}]
  %s4 = inlined_call_operand.hbm [shape: bf16[128,128], index: 4, kind: output, shape index: {1}]
  %5 = xla_tuple %s3, %s4
  %s6 = sld [smem:[#allocation0]]
  $region30: #{tpu_custom_call.1} parent=0
    _
  %s8 = ssub.s32 1, %s6
  %s9 = scalar_select 0, %s8, %s6
  $region1: #{tpu_custom_call.1} parent=0
    #allocation2 [shape = 'u8[65536]{0}', space=vmem, size = 0x10000, scoped, tag = 'output window, operand 0, single buffered']
    #allocation3 [shape = 's32[1]{0}', space=sflag, size = 0x4, scoped, tag = 'scoped memory for tpu_custom_call.1']
    #allocation4 [shape = 'u8[32768]{0}', space=vmem, size = 0x8000, scoped, tag = 'output window, operand 1, single buffered']
    #allocation5 [shape = 's32[1]{0}', space=sflag, size = 0x4, scoped, tag = 'scoped memory for tpu_custom_call.1']
    %10 = vsyncpa [#allocation3], 0
    %11 = vsyncpa [#allocation5], 0
    // Predicated region
    $region2: #{tpu_custom_call.1} parent=1 // pred_check
      _
    $region3: #{tpu_custom_call.1} parent=1 // pred_check_branch
      %13 = sbr.rel (0) target = $region5
    $region4: #{tpu_custom_call.1} parent=1 // pred_region
      _
    $region5: #{tpu_custom_call.1} parent=1 // pred_fallthru
      _
    // Predicated region
    $region6: #{tpu_custom_call.1} parent=1 // pred_check
      _
    $region7: #{tpu_custom_call.1} parent=1 // pred_check_branch
      %15 = sbr.rel (0) target = $region9
    $region8: #{tpu_custom_call.1} parent=1 // pred_region
      _
    $region9: #{tpu_custom_call.1} parent=1 // pred_fallthru
      _
    // Predicated region
    $region10: #{tpu_custom_call.1} parent=1 // pred_check
      _
    $region11: #{tpu_custom_call.1} parent=1 // pred_check_branch
      %17 = sbr.rel (0) target = $region13
    $region12: #{tpu_custom_call.1} parent=1 // pred_region
      _
    $region13: #{tpu_custom_call.1} parent=1 // pred_fallthru
      _
    %v19 = vld [vmem:[%s0] sm:$0xf]
    %v20 = vld [vmem:[%s0 + $0x4] sm:$0xf]
    %v21 = vld [vmem:[%s0 + $0x8] sm:$0xf]
    %v22 = vld [vmem:[%s0 + $0xc] sm:$0xf]
    %v23 = vld [vmem:[%s0 + $0x10] sm:$0xf]
    %v24 = vld [vmem:[%s0 + $0x14] sm:$0xf]
    %v25 = vld [vmem:[%s0 + $0x18] sm:$0xf]
    %v26 = vld [vmem:[%s0 + $0x1c] sm:$0xf]
    %v27 = vld [vmem:[%s0 + $0x20] sm:$0xf]
    %v28 = vld [vmem:[%s0 + $0x24] sm:$0xf]
    %v29 = vld [vmem:[%s0 + $0x28] sm:$0xf]
    %v30 = vld [vmem:[%s0 + $0x2c] sm:$0xf]
    %v31 = vld [vmem:[%s0 + $0x30] sm:$0xf]
    %v32 = vld [vmem:[%s0 + $0x34] sm:$0xf]
    %v33 = vld [vmem:[%s0 + $0x38] sm:$0xf]
    %v34 = vld [vmem:[%s0 + $0x3c] sm:$0xf]
    %v35 = vld [vmem:[%s1] sm:$0xff]
    %v36 = vld [vmem:[%s1 + $0x8] sm:$0xff]
    %v37 = vld [vmem:[%s2] sm:$0x3]
    %v39 = vperm.slane %v37, 0
    %v40 = vperm.slane %v37, 1
    %v59 = vunpack.c.l.b16 %v19
    %v60 = vunpack.c.l.b16 %v20
    %v61 = vunpack.c.l.b16 %v21
    %v62 = vunpack.c.l.b16 %v22
    %v63 = vunpack.c.l.b16 %v23
    %v64 = vunpack.c.l.b16 %v24
    %v65 = vunpack.c.l.b16 %v25
    %v66 = vunpack.c.l.b16 %v26
    %v67 = vunpack.c.l.b16 %v27
    %v68 = vunpack.c.l.b16 %v28
    %v69 = vunpack.c.l.b16 %v29
    %v70 = vunpack.c.l.b16 %v30
    %v71 = vunpack.c.l.b16 %v31
    %v72 = vunpack.c.l.b16 %v32
    %v73 = vunpack.c.l.b16 %v33
    %v74 = vunpack.c.l.b16 %v34
    %v75 = vpack.c.b16 %v60, %v59
    %v76 = vpack.c.b16 %v62, %v61
    %v77 = vpack.c.b16 %v64, %v63
    %v78 = vpack.c.b16 %v66, %v65
    %v79 = vpack.c.b16 %v68, %v67
    %v80 = vpack.c.b16 %v70, %v69
    %v81 = vpack.c.b16 %v72, %v71
    %v82 = vpack.c.b16 %v74, %v73
    %v85 = vunpack.c.l.b16 %v35
    %v86 = vunpack.c.h.b16 %v35
    %v87 = vunpack.c.l.b16 %v36
    %v88 = vunpack.c.h.b16 %v36
    %v89 = vpack.c.b16 %v87, %v85
    %v90 = vpack.c.b16 %v88, %v86
    %vm93 = vcmask 130048
    %v95 = vsel %vm93, %v75, 0
    %v98 = vsel %vm93, %v76, 0
    %v101 = vsel %vm93, %v77, 0
    %v104 = vsel %vm93, %v78, 0
    %v107 = vsel %vm93, %v79, 0
    %v110 = vsel %vm93, %v80, 0
    %v113 = vsel %vm93, %v81, 0
    %v116 = vsel %vm93, %v82, 0
    %118 = vmatpush.bf16.msra.mxu0 0
    %119 = vmatpush.bf16.msra.mxu0 0
    %120 = vmatpush.bf16.msra.mxu0 0
    %121 = vmatpush.bf16.msra.mxu0 0
    %122 = vmatpush.bf16.msra.mxu0 0
    %123 = vmatpush.bf16.msra.mxu0 0
    %124 = vmatpush.bf16.msra.mxu0 0
    %125 = vmatpush.bf16.msra.mxu0 %v89
    %126 = vmatmul.bf16.gmra.mxu0 %v95
    %v127 = vpop.f32.mrf.mxu0
    %v128 = vadd.f32 %v39, %v127
    %v129 = vpop.f32.mrf.mxu0
    %v130 = vadd.f32 %v39, %v129
    %131 = vmatmul.bf16.gmra.mxu0 %v98
    %v132 = vpop.f32.mrf.mxu0
    %v133 = vadd.f32 %v39, %v132
    %v134 = vpop.f32.mrf.mxu0
    %v135 = vadd.f32 %v39, %v134
    %136 = vmatmul.bf16.gmra.mxu0 %v101
    %v137 = vpop.f32.mrf.mxu0
    %v138 = vadd.f32 %v39, %v137
    %v139 = vpop.f32.mrf.mxu0
    %v140 = vadd.f32 %v39, %v139
    %141 = vmatmul.bf16.gmra.mxu0 %v104
    %v142 = vpop.f32.mrf.mxu0
    %v143 = vadd.f32 %v39, %v142
    %v144 = vpop.f32.mrf.mxu0
    %v145 = vadd.f32 %v39, %v144
    %146 = vmatmul.bf16.gmra.mxu0 %v107
    %v147 = vpop.f32.mrf.mxu0
    %v148 = vadd.f32 %v39, %v147
    %v149 = vpop.f32.mrf.mxu0
    %v150 = vadd.f32 %v39, %v149
    %151 = vmatmul.bf16.gmra.mxu0 %v110
    %v152 = vpop.f32.mrf.mxu0
    %v153 = vadd.f32 %v39, %v152
    %v154 = vpop.f32.mrf.mxu0
    %v155 = vadd.f32 %v39, %v154
    %156 = vmatmul.bf16.gmra.mxu0 %v113
    %v157 = vpop.f32.mrf.mxu0
    %v158 = vadd.f32 %v39, %v157
    %v159 = vpop.f32.mrf.mxu0
    %v160 = vadd.f32 %v39, %v159
    %161 = vmatmul.bf16.gmra.mxu0 %v116
    %v162 = vpop.f32.mrf.mxu0
    %v163 = vadd.f32 %v39, %v162
    %v164 = vpop.f32.mrf.mxu0
    %v165 = vadd.f32 %v39, %v164
    %166 = vdwg.mxu0
    %167 = vmatpush.bf16.msra.mxu0 0
    %168 = vmatpush.bf16.msra.mxu0 0
    %169 = vmatpush.bf16.msra.mxu0 0
    %170 = vmatpush.bf16.msra.mxu0 0
    %171 = vmatpush.bf16.msra.mxu0 0
    %172 = vmatpush.bf16.msra.mxu0 0
    %173 = vmatpush.bf16.msra.mxu0 0
    %174 = vmatpush.bf16.msra.mxu0 %v90
    %175 = vmatmul.bf16.gmra.mxu0 %v95
    %v176 = vpop.f32.mrf.mxu0
    %v177 = vadd.f32 %v40, %v176
    %v178 = vpop.f32.mrf.mxu0
    %v179 = vadd.f32 %v40, %v178
    %180 = vmatmul.bf16.gmra.mxu0 %v98
    %v181 = vpop.f32.mrf.mxu0
    %v182 = vadd.f32 %v40, %v181
    %v183 = vpop.f32.mrf.mxu0
    %v184 = vadd.f32 %v40, %v183
    %185 = vmatmul.bf16.gmra.mxu0 %v101
    %v186 = vpop.f32.mrf.mxu0
    %v187 = vadd.f32 %v40, %v186
    %v188 = vpop.f32.mrf.mxu0
    %v189 = vadd.f32 %v40, %v188
    %190 = vmatmul.bf16.gmra.mxu0 %v104
    %v191 = vpop.f32.mrf.mxu0
    %v192 = vadd.f32 %v40, %v191
    %v193 = vpop.f32.mrf.mxu0
    %v194 = vadd.f32 %v40, %v193
    %195 = vmatmul.bf16.gmra.mxu0 %v107
    %v196 = vpop.f32.mrf.mxu0
    %v197 = vadd.f32 %v40, %v196
    %v198 = vpop.f32.mrf.mxu0
    %v199 = vadd.f32 %v40, %v198
    %200 = vmatmul.bf16.gmra.mxu0 %v110
    %v201 = vpop.f32.mrf.mxu0
    %v202 = vadd.f32 %v40, %v201
    %v203 = vpop.f32.mrf.mxu0
    %v204 = vadd.f32 %v40, %v203
    %205 = vmatmul.bf16.gmra.mxu0 %v113
    %v206 = vpop.f32.mrf.mxu0
    %v207 = vadd.f32 %v40, %v206
    %v208 = vpop.f32.mrf.mxu0
    %v209 = vadd.f32 %v40, %v208
    %210 = vmatmul.bf16.gmra.mxu0 %v116
    %v211 = vpop.f32.mrf.mxu0
    %v212 = vadd.f32 %v40, %v211
    %v213 = vpop.f32.mrf.mxu0
    %v214 = vadd.f32 %v40, %v213
    %215 = vdwg.mxu0
    %216 = vst [vmem:[#allocation2] sm:$0xff] %v128
    %217 = vst [vmem:[#allocation2 + $0x8] sm:$0xff] %v130
    %218 = vst [vmem:[#allocation2 + $0x10] sm:$0xff] %v133
    %219 = vst [vmem:[#allocation2 + $0x18] sm:$0xff] %v135
    %220 = vst [vmem:[#allocation2 + $0x20] sm:$0xff] %v138
    %221 = vst [vmem:[#allocation2 + $0x28] sm:$0xff] %v140
    %222 = vst [vmem:[#allocation2 + $0x30] sm:$0xff] %v143
    %223 = vst [vmem:[#allocation2 + $0x38] sm:$0xff] %v145
    %224 = vst [vmem:[#allocation2 + $0x40] sm:$0xff] %v148
    %225 = vst [vmem:[#allocation2 + $0x48] sm:$0xff] %v150
    %226 = vst [vmem:[#allocation2 + $0x50] sm:$0xff] %v153
    %227 = vst [vmem:[#allocation2 + $0x58] sm:$0xff] %v155
    %228 = vst [vmem:[#allocation2 + $0x60] sm:$0xff] %v158
    %229 = vst [vmem:[#allocation2 + $0x68] sm:$0xff] %v160
    %230 = vst [vmem:[#allocation2 + $0x70] sm:$0xff] %v163
    %231 = vst [vmem:[#allocation2 + $0x78] sm:$0xff] %v165
    %v232 = vpack.c.bf16 %v177, %v177
    %v233 = vpack.c.bf16 %v179, %v179
    %v234 = vpack.c.bf16 %v182, %v182
    %v235 = vpack.c.bf16 %v184, %v184
    %v236 = vpack.c.bf16 %v187, %v187
    %v237 = vpack.c.bf16 %v189, %v189
    %v238 = vpack.c.bf16 %v192, %v192
    %v239 = vpack.c.bf16 %v194, %v194
    %v240 = vpack.c.bf16 %v197, %v197
    %v241 = vpack.c.bf16 %v199, %v199
    %v242 = vpack.c.bf16 %v202, %v202
    %v243 = vpack.c.bf16 %v204, %v204
    %v244 = vpack.c.bf16 %v207, %v207
    %v245 = vpack.c.bf16 %v209, %v209
    %v246 = vpack.c.bf16 %v212, %v212
    %v247 = vpack.c.bf16 %v214, %v214
    %248 = vst [vmem:[#allocation4] sm:$0xf] %v232
    %249 = vst [vmem:[#allocation4 + $0x4] sm:$0xf] %v233
    %250 = vst [vmem:[#allocation4 + $0x8] sm:$0xf] %v234
    %251 = vst [vmem:[#allocation4 + $0xc] sm:$0xf] %v235
    %252 = vst [vmem:[#allocation4 + $0x10] sm:$0xf] %v236
    %253 = vst [vmem:[#allocation4 + $0x14] sm:$0xf] %v237
    %254 = vst [vmem:[#allocation4 + $0x18] sm:$0xf] %v238
    %255 = vst [vmem:[#allocation4 + $0x1c] sm:$0xf] %v239
    %256 = vst [vmem:[#allocation4 + $0x20] sm:$0xf] %v240
    %257 = vst [vmem:[#allocation4 + $0x24] sm:$0xf] %v241
    %258 = vst [vmem:[#allocation4 + $0x28] sm:$0xf] %v242
    %259 = vst [vmem:[#allocation4 + $0x2c] sm:$0xf] %v243
    %260 = vst [vmem:[#allocation4 + $0x30] sm:$0xf] %v244
    %261 = vst [vmem:[#allocation4 + $0x34] sm:$0xf] %v245
    %262 = vst [vmem:[#allocation4 + $0x38] sm:$0xf] %v246
    %263 = vst [vmem:[#allocation4 + $0x3c] sm:$0xf] %v247
    // Predicated region
    $region14: #{tpu_custom_call.1} parent=1 // pred_check
      _
    $region15: #{tpu_custom_call.1} parent=1 // pred_check_branch
      %265 = sbr.rel (0) target = $region17
    $region16: #{tpu_custom_call.1} parent=1 // pred_region
      %267 = vsyncadd [#allocation3], 0
      %s268 = sshll.u32 [#allocation2], 4
      %s269 = int_to_ptr.vmem [resolvable:$true] %s268
      %s270 = sshll.u32 %s3, 4
      %s271 = int_to_ptr.hbm [resolvable:$true] %s270
      %276 = dma.vmem_to_hbm [thread:$0]  %s269, 2048, %s271, [#allocation3], 128, 128, 8
    $region17: #{tpu_custom_call.1} parent=1 // pred_fallthru
      _
    // Predicated region
    $region18: #{tpu_custom_call.1} parent=1 // pred_check
      _
    $region19: #{tpu_custom_call.1} parent=1 // pred_check_branch
      %278 = sbr.rel (0) target = $region21
    $region20: #{tpu_custom_call.1} parent=1 // pred_region
      %280 = vsyncadd [#allocation5], 0
      %s281 = sshll.u32 [#allocation4], 4
      %s282 = int_to_ptr.vmem [resolvable:$true] %s281
      %s283 = sshll.u32 %s4, 4
      %s284 = int_to_ptr.hbm [resolvable:$true] %s283
      %289 = dma.vmem_to_hbm [thread:$0]  %s282, 1024, %s284, [#allocation5], 64, 64, 4
    $region21: #{tpu_custom_call.1} parent=1 // pred_fallthru
      _
    // Predicated region
    $region22: #{tpu_custom_call.1} parent=1 // pred_check
      _
    $region23: #{tpu_custom_call.1} parent=1 // pred_check_branch
      %291 = sbr.rel (0) target = $region25
    $region24: #{tpu_custom_call.1} parent=1 // pred_region
      %293 = dma.done [#allocation3], 2048
    $region25: #{tpu_custom_call.1} parent=1 // pred_fallthru
      _
    // Predicated region
    $region26: #{tpu_custom_call.1} parent=1 // pred_check
      _
    $region27: #{tpu_custom_call.1} parent=1 // pred_check_branch
      %295 = sbr.rel (0) target = $region29
    $region28: #{tpu_custom_call.1} parent=1 // pred_region
      %297 = dma.done [#allocation5], 1024
    $region29: #{tpu_custom_call.1} parent=1 // pred_fallthru
      _
    %298 = vsyncpa [#allocation3], 1
    %299 = vsyncpa [#allocation5], 1

</llo_original>
